<compile_context>
chip_gen: v5e
topology: v5e:2x2
jax: 0.10.0
libtpu: 0.0.40
codegen_flags: <defaults>
</compile_context>

<pallas_src>
import jax
import jax.numpy as jnp
from jax.experimental import pallas as pl
from jax.experimental.pallas import tpu as pltpu

NN_LAYER_1 = 400
NN_LAYER_2 = 300


def _doubleq_kernel(s_ref, a_ref, w1s_ref, w1a_ref, b1_ref,
                    w2_ref, b2_ref, w3_ref, b3_ref, q_ref):
    # In-kernel "concat": x @ W1 == state @ W1s + action @ W1a.
    s = s_ref[...].astype(jnp.bfloat16)
    a = a_ref[...].astype(jnp.bfloat16)
    h1 = (jnp.dot(s, w1s_ref[...], preferred_element_type=jnp.float32)
          + jnp.dot(a, w1a_ref[...], preferred_element_type=jnp.float32)
          + b1_ref[...])
    h1 = jnp.maximum(h1, 0.0)                                   # ReLU (f32, VPU)

    h2 = (jnp.dot(h1.astype(jnp.bfloat16), w2_ref[...],
                  preferred_element_type=jnp.float32) + b2_ref[...])
    h2 = jnp.maximum(h2, 0.0)                                   # ReLU (f32, VPU)

    # Final (300 -> 1) layer: VPU multiply + XLU lane reduction, not an N=1
    # MXU pass. All math in f32 (v5e has no bf16 VALU).
    w3_row = w3_ref[...].astype(jnp.float32)                    # (1, NN_LAYER_2)
    q = jnp.sum(h2 * w3_row, axis=-1, keepdims=True) + b3_ref[...]
    q_ref[...] = q.astype(q_ref.dtype)


def double_q_forward(state, action, packed_params, *, tb=512):
    """Pallas equivalent of DoubleQNet.forward(state, action) -> (B, 1)."""
    w1s, w1a, b1, w2, b2, w3, b3 = packed_params
    B, state_dim = state.shape
    act_dim = state.shape and action.shape[1]

    TB = min(B, tb)                       # rows per grid step
    grid = (pl.cdiv(B, TB),)

    # Batch-blocked specs for activations; weights/biases pinned to block (0,0)
    # so they are DMA'd once and stay VMEM-resident across the grid.
    row_spec = lambda cols: pl.BlockSpec((TB, cols), lambda i: (i, 0))
    full_spec = lambda r, c: pl.BlockSpec((r, c), lambda i: (0, 0))

    return pl.pallas_call(
        _doubleq_kernel,
        out_shape=jax.ShapeDtypeStruct((B, 1), jnp.float32),
        grid=grid,
        in_specs=[
            row_spec(state_dim),                       # state
            row_spec(act_dim),                         # action
            full_spec(state_dim, NN_LAYER_1),          # W1s (bf16)
            full_spec(act_dim, NN_LAYER_1),            # W1a (bf16)
            full_spec(1, NN_LAYER_1),                  # b1  (f32)
            full_spec(NN_LAYER_1, NN_LAYER_2),         # W2  (bf16)
            full_spec(1, NN_LAYER_2),                  # b2  (f32)
            full_spec(1, NN_LAYER_2),                  # w3 row (bf16)
            full_spec(1, 1),                           # b3  (f32)
        ],
        out_specs=pl.BlockSpec((TB, 1), lambda i: (i, 0)),
        compiler_params=pltpu.CompilerParams(
            dimension_semantics=("parallel",),
            vmem_limit_bytes=32 * 1024 * 1024,
        ),
    )(state, action, w1s, w1a, b1, w2, b2, w3, b3)


def init_params(key, state_dim, act_dim):
    """PyTorch-default-style init (uniform +/- 1/sqrt(fan_in)). Weights stored
    as (in, out) so the kernel computes x @ W + b."""
    dims = [(state_dim + act_dim, NN_LAYER_1),
            (NN_LAYER_1, NN_LAYER_2),
            (NN_LAYER_2, 1)]
    params = []
    for fan_in, fan_out in dims:
        key, kw, kb = jax.random.split(key, 3)
        bound = 1.0 / jnp.sqrt(float(fan_in))
        w = jax.random.uniform(kw, (fan_in, fan_out), jnp.float32, -bound, bound)
        b = jax.random.uniform(kb, (1, fan_out), jnp.float32, -bound, bound)
        params.extend([w, b])
    return tuple(params)


def pack_params(params, state_dim):
    """One-time repack: split W1 for the in-kernel concat, cast weights to
    bf16 (halves HBM->VMEM DMA volume), keep biases f32, flatten fc_out to a
    row vector for the VPU-reduce final layer."""
    w1, b1, w2, b2, w3, b3 = params
    w1s = w1[:state_dim, :].astype(jnp.bfloat16)
    w1a = w1[state_dim:, :].astype(jnp.bfloat16)
    w2b = w2.astype(jnp.bfloat16)
    w3r = w3.reshape(1, NN_LAYER_2).astype(jnp.bfloat16)
    b3s = b3.reshape(1, 1).astype(jnp.float32)
    return (w1s, w1a, b1.astype(jnp.float32), w2b, b2.astype(jnp.float32), w3r, b3s)


def _reference(state, action, packed_params):
    """Pure-JAX reference mirroring the kernel's dtype choices."""
    w1s, w1a, b1, w2, b2, w3, b3 = packed_params
    s = state.astype(jnp.bfloat16)
    a = action.astype(jnp.bfloat16)
    h1 = jnp.maximum(
        jnp.dot(s, w1s, preferred_element_type=jnp.float32)
        + jnp.dot(a, w1a, preferred_element_type=jnp.float32) + b1, 0.0)
    h2 = jnp.maximum(
        jnp.dot(h1.astype(jnp.bfloat16), w2,
                preferred_element_type=jnp.float32) + b2, 0.0)
    return jnp.sum(h2 * w3.astype(jnp.float32), axis=-1, keepdims=True) + b3


if __name__ == "__main__":
    B, state_dim, act_dim = 8, 12, 4

    key = jax.random.PRNGKey(0)
    k_state, k_action, k_params = jax.random.split(key, 3)

    state = jax.random.normal(k_state, (B, state_dim), jnp.float32)
    action = jax.random.normal(k_action, (B, act_dim), jnp.float32)
    params = init_params(k_params, state_dim, act_dim)
    packed = pack_params(params, state_dim)

    q = double_q_forward(state, action, packed)
    q = jax.block_until_ready(q)

    q_ref = _reference(state, action, packed)
    assert q.shape == (B, 1)
    assert jnp.allclose(q, q_ref, atol=1e-3, rtol=1e-3), (
        f"max abs err {jnp.max(jnp.abs(q - q_ref))}")

    print("KERNEL_OK")
</pallas_src>

<mosaic_0001>
module attributes {stable_mosaic.version = 11 : i64} {
  func.func @_doubleq_kernel(%arg0: i32, %arg1: memref<8x12xf32, #tpu.memory_space<vmem>>, %arg2: memref<8x4xf32, #tpu.memory_space<vmem>>, %arg3: memref<12x400xbf16, #tpu.memory_space<vmem>>, %arg4: memref<4x400xbf16, #tpu.memory_space<vmem>>, %arg5: memref<1x400xf32, #tpu.memory_space<vmem>>, %arg6: memref<400x300xbf16, #tpu.memory_space<vmem>>, %arg7: memref<1x300xf32, #tpu.memory_space<vmem>>, %arg8: memref<1x300xbf16, #tpu.memory_space<vmem>>, %arg9: memref<1x1xf32, #tpu.memory_space<vmem>>, %arg10: memref<8x1xf32, #tpu.memory_space<vmem>>) attributes {dimension_semantics = [#tpu.dimension_semantics<parallel>], iteration_bounds = array<i64: 1>, scalar_prefetch = 0 : i64, scratch_operands = 0 : i64, tpu.core_type = #tpu.core_type<tc>, window_params = [{transform_indices = @transform_0, window_bounds = array<i64: 8, 12>}, {transform_indices = @transform_1, window_bounds = array<i64: 8, 4>}, {pipeline_mode = #tpu.pipeline_mode<synchronous>, transform_indices = @transform_2, window_bounds = array<i64: 12, 400>}, {pipeline_mode = #tpu.pipeline_mode<synchronous>, transform_indices = @transform_3, window_bounds = array<i64: 4, 400>}, {pipeline_mode = #tpu.pipeline_mode<synchronous>, transform_indices = @transform_4, window_bounds = array<i64: 1, 400>}, {pipeline_mode = #tpu.pipeline_mode<synchronous>, transform_indices = @transform_5, window_bounds = array<i64: 400, 300>}, {pipeline_mode = #tpu.pipeline_mode<synchronous>, transform_indices = @transform_6, window_bounds = array<i64: 1, 300>}, {pipeline_mode = #tpu.pipeline_mode<synchronous>, transform_indices = @transform_7, window_bounds = array<i64: 1, 300>}, {pipeline_mode = #tpu.pipeline_mode<synchronous>, transform_indices = @transform_8, window_bounds = array<i64: 1, 1>}, {transform_indices = @transform_9, window_bounds = array<i64: 8, 1>}]} {
    %c0 = arith.constant 0 : index
    %c0_0 = arith.constant 0 : index
    %0 = vector.load %arg1[%c0, %c0_0] : memref<8x12xf32, #tpu.memory_space<vmem>>, vector<8x12xf32>
    %1 = arith.truncf %0 : vector<8x12xf32> to vector<8x12xbf16>
    %c0_1 = arith.constant 0 : index
    %c0_2 = arith.constant 0 : index
    %2 = vector.load %arg2[%c0_1, %c0_2] : memref<8x4xf32, #tpu.memory_space<vmem>>, vector<8x4xf32>
    %3 = arith.truncf %2 : vector<8x4xf32> to vector<8x4xbf16>
    %c0_3 = arith.constant 0 : index
    %c0_4 = arith.constant 0 : index
    %4 = vector.load %arg3[%c0_3, %c0_4] : memref<12x400xbf16, #tpu.memory_space<vmem>>, vector<12x400xbf16>
    %cst = arith.constant dense<0.000000e+00> : vector<8x400xf32>
    %5 = tpu.matmul %1, %4, %cst {dimension_numbers = #tpu.dot_dimension_numbers<[1], [0], [0], [1], [0, 0, 1, 1], [], []>} : vector<8x12xbf16>, vector<12x400xbf16>, vector<8x400xf32> -> vector<8x400xf32>
    %c0_5 = arith.constant 0 : index
    %c0_6 = arith.constant 0 : index
    %6 = vector.load %arg4[%c0_5, %c0_6] : memref<4x400xbf16, #tpu.memory_space<vmem>>, vector<4x400xbf16>
    %cst_7 = arith.constant dense<0.000000e+00> : vector<8x400xf32>
    %7 = tpu.matmul %3, %6, %cst_7 {dimension_numbers = #tpu.dot_dimension_numbers<[1], [0], [0], [1], [0, 0, 1, 1], [], []>} : vector<8x4xbf16>, vector<4x400xbf16>, vector<8x400xf32> -> vector<8x400xf32>
    %8 = arith.addf %5, %7 : vector<8x400xf32>
    %c0_8 = arith.constant 0 : index
    %c0_9 = arith.constant 0 : index
    %9 = vector.load %arg5[%c0_8, %c0_9] : memref<1x400xf32, #tpu.memory_space<vmem>>, vector<1x400xf32>
    %10 = vector.broadcast %9 : vector<1x400xf32> to vector<8x400xf32>
    %11 = arith.addf %8, %10 : vector<8x400xf32>
    %cst_10 = arith.constant 0.000000e+00 : f32
    %12 = vector.broadcast %cst_10 : f32 to vector<8x400xf32>
    %13 = arith.maximumf %11, %12 : vector<8x400xf32>
    %14 = arith.truncf %13 : vector<8x400xf32> to vector<8x400xbf16>
    %c0_11 = arith.constant 0 : index
    %c0_12 = arith.constant 0 : index
    %15 = vector.load %arg6[%c0_11, %c0_12] : memref<400x300xbf16, #tpu.memory_space<vmem>>, vector<400x300xbf16>
    %cst_13 = arith.constant dense<0.000000e+00> : vector<8x300xf32>
    %16 = tpu.matmul %14, %15, %cst_13 {dimension_numbers = #tpu.dot_dimension_numbers<[1], [0], [0], [1], [0, 0, 1, 1], [], []>} : vector<8x400xbf16>, vector<400x300xbf16>, vector<8x300xf32> -> vector<8x300xf32>
    %c0_14 = arith.constant 0 : index
    %c0_15 = arith.constant 0 : index
    %17 = vector.load %arg7[%c0_14, %c0_15] : memref<1x300xf32, #tpu.memory_space<vmem>>, vector<1x300xf32>
    %18 = vector.broadcast %17 : vector<1x300xf32> to vector<8x300xf32>
    %19 = arith.addf %16, %18 : vector<8x300xf32>
    %cst_16 = arith.constant 0.000000e+00 : f32
    %20 = vector.broadcast %cst_16 : f32 to vector<8x300xf32>
    %21 = arith.maximumf %19, %20 : vector<8x300xf32>
    %c0_17 = arith.constant 0 : index
    %c0_18 = arith.constant 0 : index
    %22 = vector.load %arg8[%c0_17, %c0_18] : memref<1x300xbf16, #tpu.memory_space<vmem>>, vector<1x300xbf16>
    %23 = arith.extf %22 : vector<1x300xbf16> to vector<1x300xf32>
    %24 = vector.broadcast %23 : vector<1x300xf32> to vector<8x300xf32>
    %25 = arith.mulf %21, %24 : vector<8x300xf32>
    %cst_19 = arith.constant dense<0.000000e+00> : vector<8xf32>
    %26 = vector.multi_reduction <add>, %25, %cst_19 [1] : vector<8x300xf32> to vector<8xf32>
    %27 = vector.shape_cast %26 : vector<8xf32> to vector<8x1xf32>
    %c0_20 = arith.constant 0 : index
    %c0_21 = arith.constant 0 : index
    %28 = vector.load %arg9[%c0_20, %c0_21] : memref<1x1xf32, #tpu.memory_space<vmem>>, vector<1x1xf32>
    %29 = vector.broadcast %28 : vector<1x1xf32> to vector<8x1xf32>
    %30 = arith.addf %27, %29 : vector<8x1xf32>
    %c0_22 = arith.constant 0 : index
    %c0_23 = arith.constant 0 : index
    %31 = vector.load %arg10[%c0_22, %c0_23] : memref<8x1xf32, #tpu.memory_space<vmem>>, vector<8x1xf32>
    tpu.vector_store %arg10[%c0_22, %c0_23], %30 {strides = array<i32>} : memref<8x1xf32, #tpu.memory_space<vmem>>, vector<8x1xf32>,
    return
  }
  func.func @transform_0(%arg0: i32) -> (i32, i32) {
    %c0_i32 = arith.constant 0 : i32
    %c0_i32_0 = arith.constant 0 : i32
    return %arg0, %c0_i32 : i32, i32
  }
  func.func @transform_1(%arg0: i32) -> (i32, i32) {
    %c0_i32 = arith.constant 0 : i32
    %c0_i32_0 = arith.constant 0 : i32
    return %arg0, %c0_i32 : i32, i32
  }
  func.func @transform_2(%arg0: i32) -> (i32, i32) {
    %c0_i32 = arith.constant 0 : i32
    %c0_i32_0 = arith.constant 0 : i32
    %c0_i32_1 = arith.constant 0 : i32
    return %c0_i32, %c0_i32_0 : i32, i32
  }
  func.func @transform_3(%arg0: i32) -> (i32, i32) {
    %c0_i32 = arith.constant 0 : i32
    %c0_i32_0 = arith.constant 0 : i32
    %c0_i32_1 = arith.constant 0 : i32
    return %c0_i32, %c0_i32_0 : i32, i32
  }
  func.func @transform_4(%arg0: i32) -> (i32, i32) {
    %c0_i32 = arith.constant 0 : i32
    %c0_i32_0 = arith.constant 0 : i32
    %c0_i32_1 = arith.constant 0 : i32
    return %c0_i32, %c0_i32_0 : i32, i32
  }
  func.func @transform_5(%arg0: i32) -> (i32, i32) {
    %c0_i32 = arith.constant 0 : i32
    %c0_i32_0 = arith.constant 0 : i32
    %c0_i32_1 = arith.constant 0 : i32
    return %c0_i32, %c0_i32_0 : i32, i32
  }
  func.func @transform_6(%arg0: i32) -> (i32, i32) {
    %c0_i32 = arith.constant 0 : i32
    %c0_i32_0 = arith.constant 0 : i32
    %c0_i32_1 = arith.constant 0 : i32
    return %c0_i32, %c0_i32_0 : i32, i32
  }
  func.func @transform_7(%arg0: i32) -> (i32, i32) {
    %c0_i32 = arith.constant 0 : i32
    %c0_i32_0 = arith.constant 0 : i32
    %c0_i32_1 = arith.constant 0 : i32
    return %c0_i32, %c0_i32_0 : i32, i32
  }
  func.func @transform_8(%arg0: i32) -> (i32, i32) {
    %c0_i32 = arith.constant 0 : i32
    %c0_i32_0 = arith.constant 0 : i32
    %c0_i32_1 = arith.constant 0 : i32
    return %c0_i32, %c0_i32_0 : i32, i32
  }
  func.func @transform_9(%arg0: i32) -> (i32, i32) {
    %c0_i32 = arith.constant 0 : i32
    %c0_i32_0 = arith.constant 0 : i32
    return %arg0, %c0_i32 : i32, i32
  }
}

</mosaic_0001>

<llo_original>
// kernel: tpu_custom_call.1
$region0: #{tpu_custom_call.1}
  #allocation0 [shape = 'u32[]', space=smem, size = 0x4, offset = 0x4, fixed_abs, tag = 'smem constant byte address 0x4 - core index']
  #allocation1 [shape = 'u32[72,128]{1,0:T(1,128)}', space=vmem, size = 0x9000, scoped, tag = 'internal scratch']
  #allocation2 [shape = 'f32[1,1]{1,0:T(1,128)S(1)}', space=vmem, size = 0x200, scoped, tag = 'scoped memory for tpu_custom_call.1']
  %s0 = inlined_call_operand.vmem [shape: f32[8,12], index: 0, kind: input, shape index: {}]
  %s1 = inlined_call_operand.vmem [shape: f32[8,4], index: 1, kind: input, shape index: {}]
  %s2 = inlined_call_operand.hbm [shape: bf16[12,400], index: 2, kind: input, shape index: {}]
  %s3 = inlined_call_operand.vmem [shape: bf16[4,400], index: 3, kind: input, shape index: {}]
  %s4 = inlined_call_operand.hbm [shape: f32[1,400], index: 4, kind: input, shape index: {}]
  %s5 = inlined_call_operand.hbm [shape: bf16[400,300], index: 5, kind: input, shape index: {}]
  %s6 = inlined_call_operand.vmem [shape: f32[1,300], index: 6, kind: input, shape index: {}]
  %s7 = inlined_call_operand.hbm [shape: bf16[1,300], index: 7, kind: input, shape index: {}]
  %s8 = inlined_call_operand.<no memory space> [shape: f32[1,1], index: 8, kind: input, shape index: {}]
  %s9 = inlined_call_operand.vmem [shape: f32[8,1], index: 9, kind: output, shape index: {}]
  %s10 = sld [smem:[#allocation0]]
  $region62: #{tpu_custom_call.1} parent=0
    _
  %s12 = ssub.s32 1, %s10
  %s13 = scalar_select 0, %s12, %s10
  %v14 = vstv %s8
  %15 = vst [vmem:[#allocation2] sm:$0x1] %v14
  $region1: #{tpu_custom_call.1} parent=0
    #allocation3 [shape = 'u8[16384]{0}', space=vmem, size = 0x4000, scoped, tag = 'input window, operand 2, single buffered']
    #allocation4 [shape = 's32[1]{0}', space=sflag, size = 0x4, scoped, tag = 'scoped memory for tpu_custom_call.1']
    #allocation5 [shape = 'u8[2048]{0}', space=vmem, size = 0x800, scoped, tag = 'input window, operand 4, single buffered']
    #allocation6 [shape = 's32[1]{0}', space=sflag, size = 0x4, scoped, tag = 'scoped memory for tpu_custom_call.1']
    #allocation7 [shape = 'u8[307200]{0}', space=vmem, size = 0x4b000, scoped, tag = 'input window, operand 5, single buffered']
    #allocation8 [shape = 'u8[1536]{0}', space=vmem, size = 0x800, scoped, tag = 'input window, operand 7, single buffered']
    #allocation9 [shape = 's32[1]{0}', space=sflag, size = 0x4, scoped, tag = 'scoped memory for tpu_custom_call.1']
    %16 = vsyncpa [#allocation4], 0
    %17 = vsyncpa [#allocation6], 0
    %18 = vsyncpa [#allocation9], 0
    // Predicated region
    $region2: #{tpu_custom_call.1} parent=1 // pred_check
      _
    $region3: #{tpu_custom_call.1} parent=1 // pred_check_branch
      %20 = sbr.rel (0) target = $region5
    $region4: #{tpu_custom_call.1} parent=1 // pred_region
      _
    $region5: #{tpu_custom_call.1} parent=1 // pred_fallthru
      _
    // Predicated region
    $region6: #{tpu_custom_call.1} parent=1 // pred_check
      _
    $region7: #{tpu_custom_call.1} parent=1 // pred_check_branch
      %22 = sbr.rel (0) target = $region9
    $region8: #{tpu_custom_call.1} parent=1 // pred_region
      _
    $region9: #{tpu_custom_call.1} parent=1 // pred_fallthru
      _
    // Predicated region
    $region10: #{tpu_custom_call.1} parent=1 // pred_check
      _
    $region11: #{tpu_custom_call.1} parent=1 // pred_check_branch
      %24 = sbr.rel (0) target = $region13
    $region12: #{tpu_custom_call.1} parent=1 // pred_region
      %26 = vsyncadd [#allocation4], 0
      %s27 = sshll.u32 %s2, 4
      %s28 = int_to_ptr.hbm [resolvable:$true] %s27
      %s29 = sshll.u32 [#allocation3], 4
      %s30 = int_to_ptr.vmem [resolvable:$true] %s29
      %35 = dma.hbm_to_vmem [thread:$0]  %s28, 512, %s30, [#allocation4], 256, 256, 16
    $region13: #{tpu_custom_call.1} parent=1 // pred_fallthru
      _
    // Predicated region
    $region14: #{tpu_custom_call.1} parent=1 // pred_check
      _
    $region15: #{tpu_custom_call.1} parent=1 // pred_check_branch
      %37 = sbr.rel (0) target = $region17
    $region16: #{tpu_custom_call.1} parent=1 // pred_region
      _
    $region17: #{tpu_custom_call.1} parent=1 // pred_fallthru
      _
    // Predicated region
    $region18: #{tpu_custom_call.1} parent=1 // pred_check
      _
    $region19: #{tpu_custom_call.1} parent=1 // pred_check_branch
      %39 = sbr.rel (0) target = $region21
    $region20: #{tpu_custom_call.1} parent=1 // pred_region
      %41 = vsyncadd [#allocation6], 0
      %s43 = sshll.u32 %s4, 4
      %s44 = int_to_ptr.hbm [resolvable:$true] %s43
      %s45 = sshll.u32 [#allocation5], 4
      %s46 = int_to_ptr.vmem [resolvable:$true] %s45
      %48 = dma.hbm_to_vmem [thread:$0]  %s44, 64, %s46, [#allocation6]
    $region21: #{tpu_custom_call.1} parent=1 // pred_fallthru
      _
    // Predicated region
    $region22: #{tpu_custom_call.1} parent=1 // pred_check
      _
    $region23: #{tpu_custom_call.1} parent=1 // pred_check_branch
      %50 = sbr.rel (0) target = $region25
    $region24: #{tpu_custom_call.1} parent=1 // pred_region
      %52 = vsyncadd [#allocation6], 0
      %s53 = sshll.u32 %s5, 4
      %s54 = int_to_ptr.hbm [resolvable:$true] %s53
      %s55 = sshll.u32 [#allocation7], 4
      %s56 = int_to_ptr.vmem [resolvable:$true] %s55
      %61 = dma.hbm_to_vmem [thread:$0]  %s54, 9600, %s56, [#allocation6], 192, 192, 12
    $region25: #{tpu_custom_call.1} parent=1 // pred_fallthru
      _
    // Predicated region
    $region26: #{tpu_custom_call.1} parent=1 // pred_check
      _
    $region27: #{tpu_custom_call.1} parent=1 // pred_check_branch
      %63 = sbr.rel (0) target = $region29
    $region28: #{tpu_custom_call.1} parent=1 // pred_region
      _
    $region29: #{tpu_custom_call.1} parent=1 // pred_fallthru
      _
    // Predicated region
    $region30: #{tpu_custom_call.1} parent=1 // pred_check
      _
    $region31: #{tpu_custom_call.1} parent=1 // pred_check_branch
      %65 = sbr.rel (0) target = $region33
    $region32: #{tpu_custom_call.1} parent=1 // pred_region
      %67 = vsyncadd [#allocation9], 0
      %s69 = sshll.u32 %s7, 4
      %s70 = int_to_ptr.hbm [resolvable:$true] %s69
      %s71 = sshll.u32 [#allocation8], 4
      %s72 = int_to_ptr.vmem [resolvable:$true] %s71
      %74 = dma.hbm_to_vmem [thread:$0]  %s70, 48, %s72, [#allocation9]
    $region33: #{tpu_custom_call.1} parent=1 // pred_fallthru
      _
    // Predicated region
    $region34: #{tpu_custom_call.1} parent=1 // pred_check
      _
    $region35: #{tpu_custom_call.1} parent=1 // pred_check_branch
      %76 = sbr.rel (0) target = $region37
    $region36: #{tpu_custom_call.1} parent=1 // pred_region
      _
    $region37: #{tpu_custom_call.1} parent=1 // pred_fallthru
      _
    // Predicated region
    $region38: #{tpu_custom_call.1} parent=1 // pred_check
      _
    $region39: #{tpu_custom_call.1} parent=1 // pred_check_branch
      %78 = sbr.rel (0) target = $region41
    $region40: #{tpu_custom_call.1} parent=1 // pred_region
      %80 = dma.done [#allocation4], 512
    $region41: #{tpu_custom_call.1} parent=1 // pred_fallthru
      _
    // Predicated region
    $region42: #{tpu_custom_call.1} parent=1 // pred_check
      _
    $region43: #{tpu_custom_call.1} parent=1 // pred_check_branch
      %82 = sbr.rel (0) target = $region45
    $region44: #{tpu_custom_call.1} parent=1 // pred_region
      %84 = dma.done [#allocation6], 64
    $region45: #{tpu_custom_call.1} parent=1 // pred_fallthru
      _
    // Predicated region
    $region46: #{tpu_custom_call.1} parent=1 // pred_check
      _
    $region47: #{tpu_custom_call.1} parent=1 // pred_check_branch
      %86 = sbr.rel (0) target = $region49
    $region48: #{tpu_custom_call.1} parent=1 // pred_region
      %88 = dma.done [#allocation6], 9600
    $region49: #{tpu_custom_call.1} parent=1 // pred_fallthru
      _
    // Predicated region
    $region50: #{tpu_custom_call.1} parent=1 // pred_check
      _
    $region51: #{tpu_custom_call.1} parent=1 // pred_check_branch
      %90 = sbr.rel (0) target = $region53
    $region52: #{tpu_custom_call.1} parent=1 // pred_region
      %92 = dma.done [#allocation9], 48
    $region53: #{tpu_custom_call.1} parent=1 // pred_fallthru
      _
    %v94 = vld [vmem:[%s0] sm:$0xff]
    %v95 = vpack.c.bf16 %v94, %v94
    %v96 = vld [vmem:[%s1] sm:$0xff]
    %v97 = vpack.c.bf16 %v96, %v96
    %v98 = vld [vmem:[#allocation3] sm:$0xff]
    %v99 = vld [vmem:[#allocation3 + $0x8] sm:$0xff]
    %v100 = vld [vmem:[#allocation3 + $0x10] sm:$0x33]
    %v101 = vld [vmem:[#allocation3 + $0x18] sm:$0x33]
    %v102 = vld [vmem:[%s3] sm:$0xff]
    %104 = vst [vmem:[#allocation1] ss:$4 sm:$0xff] %v102
    %v105 = vld.sshfl [vmem:[#allocation1] sm:$0xff pattern:$0x73625140]
    %v106 = vld.sshfl [vmem:[#allocation1 + $0x8] sm:$0xff pattern:$0x73625140]
    %v107 = vld.sshfl [vmem:[#allocation1 + $0x10] sm:$0xff pattern:$0x73625140]
    %v108 = vld.sshfl [vmem:[#allocation1 + $0x18] sm:$0xff pattern:$0x73625140]
    %vm109 = vcmask 31744
    %v111 = vsel %vm109, %v97, 0
    %vm113 = vcmask 1041408
    %v114 = vsel %vm113, %v105, 0
    %v116 = vsel %vm113, %v106, 0
    %v118 = vsel %vm113, %v107, 0
    %v120 = vsel %vm113, %v108, 0
    %122 = vmatpush.bf16.msra.mxu0 0
    %123 = vmatpush.bf16.msra.mxu0 0
    %124 = vmatpush.bf16.msra.mxu0 0
    %125 = vmatpush.bf16.msra.mxu0 0
    %126 = vmatpush.bf16.msra.mxu0 0
    %127 = vmatpush.bf16.msra.mxu0 0
    %128 = vmatpush.bf16.msra.mxu0 0
    %129 = vmatpush.bf16.msra.mxu0 %v114
    %130 = vmatmul.bf16.gmra.mxu0 %v111
    %v131 = vpop.f32.mrf.mxu0
    %v132 = vadd.f32 0.0, %v131
    %v133 = vpop.f32.mrf.mxu0
    %134 = vdwg.mxu0
    %135 = vmatpush.bf16.msra.mxu0 0
    %136 = vmatpush.bf16.msra.mxu0 0
    %137 = vmatpush.bf16.msra.mxu0 0
    %138 = vmatpush.bf16.msra.mxu0 0
    %139 = vmatpush.bf16.msra.mxu0 0
    %140 = vmatpush.bf16.msra.mxu0 0
    %141 = vmatpush.bf16.msra.mxu0 0
    %142 = vmatpush.bf16.msra.mxu0 %v116
    %143 = vmatmul.bf16.gmra.mxu0 %v111
    %v144 = vpop.f32.mrf.mxu0
    %v145 = vadd.f32 0.0, %v144
    %v146 = vpop.f32.mrf.mxu0
    %147 = vdwg.mxu0
    %148 = vmatpush.bf16.msra.mxu0 0
    %149 = vmatpush.bf16.msra.mxu0 0
    %150 = vmatpush.bf16.msra.mxu0 0
    %151 = vmatpush.bf16.msra.mxu0 0
    %152 = vmatpush.bf16.msra.mxu0 0
    %153 = vmatpush.bf16.msra.mxu0 0
    %154 = vmatpush.bf16.msra.mxu0 0
    %155 = vmatpush.bf16.msra.mxu0 %v118
    %156 = vmatmul.bf16.gmra.mxu0 %v111
    %v157 = vpop.f32.mrf.mxu0
    %v158 = vadd.f32 0.0, %v157
    %v159 = vpop.f32.mrf.mxu0
    %160 = vdwg.mxu0
    %161 = vmatpush.bf16.msra.mxu0 0
    %162 = vmatpush.bf16.msra.mxu0 0
    %163 = vmatpush.bf16.msra.mxu0 0
    %164 = vmatpush.bf16.msra.mxu0 0
    %165 = vmatpush.bf16.msra.mxu0 0
    %166 = vmatpush.bf16.msra.mxu0 0
    %167 = vmatpush.bf16.msra.mxu0 0
    %168 = vmatpush.bf16.msra.mxu0 %v120
    %169 = vmatmul.bf16.gmra.mxu0 %v111
    %v170 = vpop.f32.mrf.mxu0
    %v171 = vadd.f32 0.0, %v170
    %v172 = vpop.f32.mrf.mxu0
    %173 = vdwg.mxu0
    %v178 = vunpack.c.l.b16 %v98
    %v179 = vunpack.c.h.b16 %v98
    %v180 = vunpack.c.l.b16 %v99
    %v181 = vunpack.c.h.b16 %v99
    %v182 = vunpack.c.l.b16 %v100
    %v183 = vunpack.c.h.b16 %v100
    %v184 = vunpack.c.l.b16 %v101
    %v185 = vunpack.c.h.b16 %v101
    %v186 = vpack.c.b16 %v182, %v178
    %v187 = vpack.c.b16 %v183, %v179
    %v188 = vpack.c.b16 %v184, %v180
    %v189 = vpack.c.b16 %v185, %v181
    %vm190 = vcmask 97280
    %v192 = vsel %vm190, %v95, 0
    %vm194 = vcmask 1045504
    %v196 = vsel %vm194, %v186, 0
    %v199 = vsel %vm194, %v187, 0
    %v202 = vsel %vm194, %v188, 0
    %v205 = vsel %vm194, %v189, 0
    %207 = vmatpush.bf16.msra.mxu0 0
    %208 = vmatpush.bf16.msra.mxu0 0
    %209 = vmatpush.bf16.msra.mxu0 0
    %210 = vmatpush.bf16.msra.mxu0 0
    %211 = vmatpush.bf16.msra.mxu0 0
    %212 = vmatpush.bf16.msra.mxu0 0
    %213 = vmatpush.bf16.msra.mxu0 0
    %214 = vmatpush.bf16.msra.mxu0 %v196
    %215 = vmatmul.bf16.gmra.mxu0 %v192
    %v216 = vpop.f32.mrf.mxu0
    %v217 = vadd.f32 %v132, %v216
    %v218 = vpop.f32.mrf.mxu0
    %219 = vdwg.mxu0
    %220 = vmatpush.bf16.msra.mxu0 0
    %221 = vmatpush.bf16.msra.mxu0 0
    %222 = vmatpush.bf16.msra.mxu0 0
    %223 = vmatpush.bf16.msra.mxu0 0
    %224 = vmatpush.bf16.msra.mxu0 0
    %225 = vmatpush.bf16.msra.mxu0 0
    %226 = vmatpush.bf16.msra.mxu0 0
    %227 = vmatpush.bf16.msra.mxu0 %v199
    %228 = vmatmul.bf16.gmra.mxu0 %v192
    %v229 = vpop.f32.mrf.mxu0
    %v230 = vadd.f32 %v145, %v229
    %v231 = vpop.f32.mrf.mxu0
    %232 = vdwg.mxu0
    %233 = vmatpush.bf16.msra.mxu0 0
    %234 = vmatpush.bf16.msra.mxu0 0
    %235 = vmatpush.bf16.msra.mxu0 0
    %236 = vmatpush.bf16.msra.mxu0 0
    %237 = vmatpush.bf16.msra.mxu0 0
    %238 = vmatpush.bf16.msra.mxu0 0
    %239 = vmatpush.bf16.msra.mxu0 0
    %240 = vmatpush.bf16.msra.mxu0 %v202
    %241 = vmatmul.bf16.gmra.mxu0 %v192
    %v242 = vpop.f32.mrf.mxu0
    %v243 = vadd.f32 %v158, %v242
    %v244 = vpop.f32.mrf.mxu0
    %245 = vdwg.mxu0
    %246 = vmatpush.bf16.msra.mxu0 0
    %247 = vmatpush.bf16.msra.mxu0 0
    %248 = vmatpush.bf16.msra.mxu0 0
    %249 = vmatpush.bf16.msra.mxu0 0
    %250 = vmatpush.bf16.msra.mxu0 0
    %251 = vmatpush.bf16.msra.mxu0 0
    %252 = vmatpush.bf16.msra.mxu0 0
    %253 = vmatpush.bf16.msra.mxu0 %v205
    %254 = vmatmul.bf16.gmra.mxu0 %v192
    %v255 = vpop.f32.mrf.mxu0
    %v256 = vadd.f32 %v171, %v255
    %v257 = vpop.f32.mrf.mxu0
    %258 = vdwg.mxu0
    %v259 = vld [vmem:[#allocation5] sm:$0xf]
    %v261 = vperm.slane %v259, 0
    %v262 = vperm.slane %v259, 1
    %v263 = vperm.slane %v259, 2
    %v264 = vperm.slane %v259, 3
    %v269 = vadd.f32 %v217, %v261
    %v270 = vadd.f32 %v230, %v262
    %v271 = vadd.f32 %v243, %v263
    %v272 = vadd.f32 %v256, %v264
    %v273 = vmax.f32 %v269, 0.0
    %v274 = vmax.f32 %v270, 0.0
    %v275 = vmax.f32 %v271, 0.0
    %v276 = vmax.f32 %v272, 0.0
    %v277 = vpack.c.bf16 %v273, %v273
    %v278 = vpack.c.bf16 %v274, %v274
    %v279 = vpack.c.bf16 %v275, %v275
    %v280 = vpack.c.bf16 %v276, %v276
    %v281 = vld [vmem:[#allocation7] sm:$0xff]
    %v282 = vld [vmem:[#allocation7 + $0x8] sm:$0xf]
    %v283 = vld [vmem:[#allocation7 + $0xc] sm:$0xff]
    %v284 = vld [vmem:[#allocation7 + $0x14] sm:$0xf]
    %v285 = vld [vmem:[#allocation7 + $0x18] sm:$0xff]
    %v286 = vld [vmem:[#allocation7 + $0x20] sm:$0xf]
    %v287 = vld [vmem:[#allocation7 + $0x24] sm:$0xff]
    %v288 = vld [vmem:[#allocation7 + $0x2c] sm:$0xf]
    %v289 = vld [vmem:[#allocation7 + $0x30] sm:$0xff]
    %v290 = vld [vmem:[#allocation7 + $0x38] sm:$0xf]
    %v291 = vld [vmem:[#allocation7 + $0x3c] sm:$0xff]
    %v292 = vld [vmem:[#allocation7 + $0x44] sm:$0xf]
    %v293 = vld [vmem:[#allocation7 + $0x48] sm:$0xff]
    %v294 = vld [vmem:[#allocation7 + $0x50] sm:$0xf]
    %v295 = vld [vmem:[#allocation7 + $0x54] sm:$0xff]
    %v296 = vld [vmem:[#allocation7 + $0x5c] sm:$0xf]
    %v297 = vld [vmem:[#allocation7 + $0x60] sm:$0xff]
    %v298 = vld [vmem:[#allocation7 + $0x68] sm:$0xf]
    %v299 = vld [vmem:[#allocation7 + $0x6c] sm:$0xff]
    %v300 = vld [vmem:[#allocation7 + $0x74] sm:$0xf]
    %v301 = vld [vmem:[#allocation7 + $0x78] sm:$0xff]
    %v302 = vld [vmem:[#allocation7 + $0x80] sm:$0xf]
    %v303 = vld [vmem:[#allocation7 + $0x84] sm:$0xff]
    %v304 = vld [vmem:[#allocation7 + $0x8c] sm:$0xf]
    %v305 = vld [vmem:[#allocation7 + $0x90] sm:$0xff]
    %v306 = vld [vmem:[#allocation7 + $0x98] sm:$0xf]
    %v307 = vld [vmem:[#allocation7 + $0x9c] sm:$0xff]
    %v308 = vld [vmem:[#allocation7 + $0xa4] sm:$0xf]
    %v309 = vld [vmem:[#allocation7 + $0xa8] sm:$0xff]
    %v310 = vld [vmem:[#allocation7 + $0xb0] sm:$0xf]
    %v311 = vld [vmem:[#allocation7 + $0xb4] sm:$0xff]
    %v312 = vld [vmem:[#allocation7 + $0xbc] sm:$0xf]
    %v313 = vld [vmem:[#allocation7 + $0xc0] sm:$0xff]
    %v314 = vld [vmem:[#allocation7 + $0xc8] sm:$0xf]
    %v315 = vld [vmem:[#allocation7 + $0xcc] sm:$0xff]
    %v316 = vld [vmem:[#allocation7 + $0xd4] sm:$0xf]
    %v317 = vld [vmem:[#allocation7 + $0xd8] sm:$0xff]
    %v318 = vld [vmem:[#allocation7 + $0xe0] sm:$0xf]
    %v319 = vld [vmem:[#allocation7 + $0xe4] sm:$0xff]
    %v320 = vld [vmem:[#allocation7 + $0xec] sm:$0xf]
    %v321 = vld [vmem:[#allocation7 + $0xf0] sm:$0xff]
    %v322 = vld [vmem:[#allocation7 + $0xf8] sm:$0xf]
    %v323 = vld [vmem:[#allocation7 + $0xfc] sm:$0xff]
    %v324 = vld [vmem:[#allocation7 + $0x104] sm:$0xf]
    %v325 = vld [vmem:[#allocation7 + $0x108] sm:$0xff]
    %v326 = vld [vmem:[#allocation7 + $0x110] sm:$0xf]
    %v327 = vld [vmem:[#allocation7 + $0x114] sm:$0xff]
    %v328 = vld [vmem:[#allocation7 + $0x11c] sm:$0xf]
    %v329 = vld [vmem:[#allocation7 + $0x120] sm:$0xff]
    %v330 = vld [vmem:[#allocation7 + $0x128] sm:$0xf]
    %v331 = vld [vmem:[#allocation7 + $0x12c] sm:$0xff]
    %v332 = vld [vmem:[#allocation7 + $0x134] sm:$0xf]
    %v333 = vld [vmem:[#allocation7 + $0x138] sm:$0xff]
    %v334 = vld [vmem:[#allocation7 + $0x140] sm:$0xf]
    %v335 = vld [vmem:[#allocation7 + $0x144] sm:$0xff]
    %v336 = vld [vmem:[#allocation7 + $0x14c] sm:$0xf]
    %v337 = vld [vmem:[#allocation7 + $0x150] sm:$0xff]
    %v338 = vld [vmem:[#allocation7 + $0x158] sm:$0xf]
    %v339 = vld [vmem:[#allocation7 + $0x15c] sm:$0xff]
    %v340 = vld [vmem:[#allocation7 + $0x164] sm:$0xf]
    %v341 = vld [vmem:[#allocation7 + $0x168] sm:$0xff]
    %v342 = vld [vmem:[#allocation7 + $0x170] sm:$0xf]
    %v343 = vld [vmem:[#allocation7 + $0x174] sm:$0xff]
    %v344 = vld [vmem:[#allocation7 + $0x17c] sm:$0xf]
    %v345 = vld [vmem:[#allocation7 + $0x180] sm:$0xff]
    %v346 = vld [vmem:[#allocation7 + $0x188] sm:$0xf]
    %v347 = vld [vmem:[#allocation7 + $0x18c] sm:$0xff]
    %v348 = vld [vmem:[#allocation7 + $0x194] sm:$0xf]
    %v349 = vld [vmem:[#allocation7 + $0x198] sm:$0xff]
    %v350 = vld [vmem:[#allocation7 + $0x1a0] sm:$0xf]
    %v351 = vld [vmem:[#allocation7 + $0x1a4] sm:$0xff]
    %v352 = vld [vmem:[#allocation7 + $0x1ac] sm:$0xf]
    %v353 = vld [vmem:[#allocation7 + $0x1b0] sm:$0xff]
    %v354 = vld [vmem:[#allocation7 + $0x1b8] sm:$0xf]
    %v355 = vld [vmem:[#allocation7 + $0x1bc] sm:$0xff]
    %v356 = vld [vmem:[#allocation7 + $0x1c4] sm:$0xf]
    %v357 = vld [vmem:[#allocation7 + $0x1c8] sm:$0xff]
    %v358 = vld [vmem:[#allocation7 + $0x1d0] sm:$0xf]
    %v359 = vld [vmem:[#allocation7 + $0x1d4] sm:$0xff]
    %v360 = vld [vmem:[#allocation7 + $0x1dc] sm:$0xf]
    %v361 = vld [vmem:[#allocation7 + $0x1e0] sm:$0xff]
    %v362 = vld [vmem:[#allocation7 + $0x1e8] sm:$0xf]
    %v363 = vld [vmem:[#allocation7 + $0x1ec] sm:$0xff]
    %v364 = vld [vmem:[#allocation7 + $0x1f4] sm:$0xf]
    %v365 = vld [vmem:[#allocation7 + $0x1f8] sm:$0xff]
    %v366 = vld [vmem:[#allocation7 + $0x200] sm:$0xf]
    %v367 = vld [vmem:[#allocation7 + $0x204] sm:$0xff]
    %v368 = vld [vmem:[#allocation7 + $0x20c] sm:$0xf]
    %v369 = vld [vmem:[#allocation7 + $0x210] sm:$0xff]
    %v370 = vld [vmem:[#allocation7 + $0x218] sm:$0xf]
    %v371 = vld [vmem:[#allocation7 + $0x21c] sm:$0xff]
    %v372 = vld [vmem:[#allocation7 + $0x224] sm:$0xf]
    %v373 = vld [vmem:[#allocation7 + $0x228] sm:$0xff]
    %v374 = vld [vmem:[#allocation7 + $0x230] sm:$0xf]
    %v375 = vld [vmem:[#allocation7 + $0x234] sm:$0xff]
    %v376 = vld [vmem:[#allocation7 + $0x23c] sm:$0xf]
    %v377 = vld [vmem:[#allocation7 + $0x240] sm:$0xff]
    %v378 = vld [vmem:[#allocation7 + $0x248] sm:$0xf]
    %v379 = vld [vmem:[#allocation7 + $0x24c] sm:$0xff]
    %v380 = vld [vmem:[#allocation7 + $0x254] sm:$0xf]
    %v381 = vld [vmem:[%s6] sm:$0x7]
    %v383 = vperm.slane %v381, 0
    %v384 = vperm.slane %v381, 1
    %v385 = vperm.slane %v381, 2
    %v489 = vunpack.c.l.b16 %v281
    %v490 = vunpack.c.h.b16 %v281
    %v491 = vunpack.c.l.b16 %v282
    %v492 = vunpack.c.l.b16 %v283
    %v493 = vunpack.c.h.b16 %v283
    %v494 = vunpack.c.l.b16 %v284
    %v495 = vunpack.c.l.b16 %v285
    %v496 = vunpack.c.h.b16 %v285
    %v497 = vunpack.c.l.b16 %v286
    %v498 = vunpack.c.l.b16 %v287
    %v499 = vunpack.c.h.b16 %v287
    %v500 = vunpack.c.l.b16 %v288
    %v501 = vunpack.c.l.b16 %v289
    %v502 = vunpack.c.h.b16 %v289
    %v503 = vunpack.c.l.b16 %v290
    %v504 = vunpack.c.l.b16 %v291
    %v505 = vunpack.c.h.b16 %v291
    %v506 = vunpack.c.l.b16 %v292
    %v507 = vunpack.c.l.b16 %v293
    %v508 = vunpack.c.h.b16 %v293
    %v509 = vunpack.c.l.b16 %v294
    %v510 = vunpack.c.l.b16 %v295
    %v511 = vunpack.c.h.b16 %v295
    %v512 = vunpack.c.l.b16 %v296
    %v513 = vunpack.c.l.b16 %v297
    %v514 = vunpack.c.h.b16 %v297
    %v515 = vunpack.c.l.b16 %v298
    %v516 = vunpack.c.l.b16 %v299
    %v517 = vunpack.c.h.b16 %v299
    %v518 = vunpack.c.l.b16 %v300
    %v519 = vunpack.c.l.b16 %v301
    %v520 = vunpack.c.h.b16 %v301
    %v521 = vunpack.c.l.b16 %v302
    %v522 = vunpack.c.l.b16 %v303
    %v523 = vunpack.c.h.b16 %v303
    %v524 = vunpack.c.l.b16 %v304
    %v525 = vunpack.c.l.b16 %v305
    %v526 = vunpack.c.h.b16 %v305
    %v527 = vunpack.c.l.b16 %v306
    %v528 = vunpack.c.l.b16 %v307
    %v529 = vunpack.c.h.b16 %v307
    %v530 = vunpack.c.l.b16 %v308
    %v531 = vunpack.c.l.b16 %v309
    %v532 = vunpack.c.h.b16 %v309
    %v533 = vunpack.c.l.b16 %v310
    %v534 = vunpack.c.l.b16 %v311
    %v535 = vunpack.c.h.b16 %v311
    %v536 = vunpack.c.l.b16 %v312
    %v537 = vunpack.c.l.b16 %v313
    %v538 = vunpack.c.h.b16 %v313
    %v539 = vunpack.c.l.b16 %v314
    %v540 = vunpack.c.l.b16 %v315
    %v541 = vunpack.c.h.b16 %v315
    %v542 = vunpack.c.l.b16 %v316
    %v543 = vunpack.c.l.b16 %v317
    %v544 = vunpack.c.h.b16 %v317
    %v545 = vunpack.c.l.b16 %v318
    %v546 = vunpack.c.l.b16 %v319
    %v547 = vunpack.c.h.b16 %v319
    %v548 = vunpack.c.l.b16 %v320
    %v549 = vunpack.c.l.b16 %v321
    %v550 = vunpack.c.h.b16 %v321
    %v551 = vunpack.c.l.b16 %v322
    %v552 = vunpack.c.l.b16 %v323
    %v553 = vunpack.c.h.b16 %v323
    %v554 = vunpack.c.l.b16 %v324
    %v555 = vunpack.c.l.b16 %v325
    %v556 = vunpack.c.h.b16 %v325
    %v557 = vunpack.c.l.b16 %v326
    %v558 = vunpack.c.l.b16 %v327
    %v559 = vunpack.c.h.b16 %v327
    %v560 = vunpack.c.l.b16 %v328
    %v561 = vunpack.c.l.b16 %v329
    %v562 = vunpack.c.h.b16 %v329
    %v563 = vunpack.c.l.b16 %v330
    %v564 = vunpack.c.l.b16 %v331
    %v565 = vunpack.c.h.b16 %v331
    %v566 = vunpack.c.l.b16 %v332
    %v567 = vunpack.c.l.b16 %v333
    %v568 = vunpack.c.h.b16 %v333
    %v569 = vunpack.c.l.b16 %v334
    %v570 = vunpack.c.l.b16 %v335
    %v571 = vunpack.c.h.b16 %v335
    %v572 = vunpack.c.l.b16 %v336
    %v573 = vunpack.c.l.b16 %v337
    %v574 = vunpack.c.h.b16 %v337
    %v575 = vunpack.c.l.b16 %v338
    %v576 = vunpack.c.l.b16 %v339
    %v577 = vunpack.c.h.b16 %v339
    %v578 = vunpack.c.l.b16 %v340
    %v579 = vunpack.c.l.b16 %v341
    %v580 = vunpack.c.h.b16 %v341
    %v581 = vunpack.c.l.b16 %v342
    %v582 = vunpack.c.l.b16 %v343
    %v583 = vunpack.c.h.b16 %v343
    %v584 = vunpack.c.l.b16 %v344
    %v585 = vunpack.c.l.b16 %v345
    %v586 = vunpack.c.h.b16 %v345
    %v587 = vunpack.c.l.b16 %v346
    %v588 = vunpack.c.l.b16 %v347
    %v589 = vunpack.c.h.b16 %v347
    %v590 = vunpack.c.l.b16 %v348
    %v591 = vunpack.c.l.b16 %v349
    %v592 = vunpack.c.h.b16 %v349
    %v593 = vunpack.c.l.b16 %v350
    %v594 = vunpack.c.l.b16 %v351
    %v595 = vunpack.c.h.b16 %v351
    %v596 = vunpack.c.l.b16 %v352
    %v597 = vunpack.c.l.b16 %v353
    %v598 = vunpack.c.h.b16 %v353
    %v599 = vunpack.c.l.b16 %v354
    %v600 = vunpack.c.l.b16 %v355
    %v601 = vunpack.c.h.b16 %v355
    %v602 = vunpack.c.l.b16 %v356
    %v603 = vunpack.c.l.b16 %v357
    %v604 = vunpack.c.h.b16 %v357
    %v605 = vunpack.c.l.b16 %v358
    %v606 = vunpack.c.l.b16 %v359
    %v607 = vunpack.c.h.b16 %v359
    %v608 = vunpack.c.l.b16 %v360
    %v609 = vunpack.c.l.b16 %v361
    %v610 = vunpack.c.h.b16 %v361
    %v611 = vunpack.c.l.b16 %v362
    %v612 = vunpack.c.l.b16 %v363
    %v613 = vunpack.c.h.b16 %v363
    %v614 = vunpack.c.l.b16 %v364
    %v615 = vunpack.c.l.b16 %v365
    %v616 = vunpack.c.h.b16 %v365
    %v617 = vunpack.c.l.b16 %v366
    %v618 = vunpack.c.l.b16 %v367
    %v619 = vunpack.c.h.b16 %v367
    %v620 = vunpack.c.l.b16 %v368
    %v621 = vunpack.c.l.b16 %v369
    %v622 = vunpack.c.h.b16 %v369
    %v623 = vunpack.c.l.b16 %v370
    %v624 = vunpack.c.l.b16 %v371
    %v625 = vunpack.c.h.b16 %v371
    %v626 = vunpack.c.l.b16 %v372
    %v627 = vunpack.c.l.b16 %v373
    %v628 = vunpack.c.h.b16 %v373
    %v629 = vunpack.c.l.b16 %v374
    %v630 = vunpack.c.l.b16 %v375
    %v631 = vunpack.c.h.b16 %v375
    %v632 = vunpack.c.l.b16 %v376
    %v633 = vunpack.c.l.b16 %v377
    %v634 = vunpack.c.h.b16 %v377
    %v635 = vunpack.c.l.b16 %v378
    %v636 = vunpack.c.l.b16 %v379
    %v637 = vunpack.c.h.b16 %v379
    %v638 = vunpack.c.l.b16 %v380
    %v639 = vpack.c.b16 %v492, %v489
    %v640 = vpack.c.b16 %v493, %v490
    %v641 = vpack.c.b16 %v494, %v491
    %v642 = vpack.c.b16 %v498, %v495
    %v643 = vpack.c.b16 %v499, %v496
    %v644 = vpack.c.b16 %v500, %v497
    %v645 = vpack.c.b16 %v504, %v501
    %v646 = vpack.c.b16 %v505, %v502
    %v647 = vpack.c.b16 %v506, %v503
    %v648 = vpack.c.b16 %v510, %v507
    %v649 = vpack.c.b16 %v511, %v508
    %v650 = vpack.c.b16 %v512, %v509
    %v651 = vpack.c.b16 %v516, %v513
    %v652 = vpack.c.b16 %v517, %v514
    %v653 = vpack.c.b16 %v518, %v515
    %v654 = vpack.c.b16 %v522, %v519
    %v655 = vpack.c.b16 %v523, %v520
    %v656 = vpack.c.b16 %v524, %v521
    %v657 = vpack.c.b16 %v528, %v525
    %v658 = vpack.c.b16 %v529, %v526
    %v659 = vpack.c.b16 %v530, %v527
    %v660 = vpack.c.b16 %v534, %v531
    %v661 = vpack.c.b16 %v535, %v532
    %v662 = vpack.c.b16 %v536, %v533
    %v663 = vpack.c.b16 %v540, %v537
    %v664 = vpack.c.b16 %v541, %v538
    %v665 = vpack.c.b16 %v542, %v539
    %v666 = vpack.c.b16 %v546, %v543
    %v667 = vpack.c.b16 %v547, %v544
    %v668 = vpack.c.b16 %v548, %v545
    %v669 = vpack.c.b16 %v552, %v549
    %v670 = vpack.c.b16 %v553, %v550
    %v671 = vpack.c.b16 %v554, %v551
    %v672 = vpack.c.b16 %v558, %v555
    %v673 = vpack.c.b16 %v559, %v556
    %v674 = vpack.c.b16 %v560, %v557
    %v675 = vpack.c.b16 %v564, %v561
    %v676 = vpack.c.b16 %v565, %v562
    %v677 = vpack.c.b16 %v566, %v563
    %v678 = vpack.c.b16 %v570, %v567
    %v679 = vpack.c.b16 %v571, %v568
    %v680 = vpack.c.b16 %v572, %v569
    %v681 = vpack.c.b16 %v576, %v573
    %v682 = vpack.c.b16 %v577, %v574
    %v683 = vpack.c.b16 %v578, %v575
    %v684 = vpack.c.b16 %v582, %v579
    %v685 = vpack.c.b16 %v583, %v580
    %v686 = vpack.c.b16 %v584, %v581
    %v687 = vpack.c.b16 %v588, %v585
    %v688 = vpack.c.b16 %v589, %v586
    %v689 = vpack.c.b16 %v590, %v587
    %v690 = vpack.c.b16 %v594, %v591
    %v691 = vpack.c.b16 %v595, %v592
    %v692 = vpack.c.b16 %v596, %v593
    %v693 = vpack.c.b16 %v600, %v597
    %v694 = vpack.c.b16 %v601, %v598
    %v695 = vpack.c.b16 %v602, %v599
    %v696 = vpack.c.b16 %v606, %v603
    %v697 = vpack.c.b16 %v607, %v604
    %v698 = vpack.c.b16 %v608, %v605
    %v699 = vpack.c.b16 %v612, %v609
    %v700 = vpack.c.b16 %v613, %v610
    %v701 = vpack.c.b16 %v614, %v611
    %v702 = vpack.c.b16 %v618, %v615
    %v703 = vpack.c.b16 %v619, %v616
    %v704 = vpack.c.b16 %v620, %v617
    %v705 = vpack.c.b16 %v624, %v621
    %v706 = vpack.c.b16 %v625, %v622
    %v707 = vpack.c.b16 %v626, %v623
    %v708 = vpack.c.b16 %v630, %v627
    %v709 = vpack.c.b16 %v631, %v628
    %v710 = vpack.c.b16 %v632, %v629
    %v711 = vpack.c.b16 %v636, %v633
    %v712 = vpack.c.b16 %v637, %v634
    %v713 = vpack.c.b16 %v638, %v635
    %vm789 = vcmask 130048
    %v791 = vsel %vm789, %v280, 0
    %793 = vmatpush.bf16.msra.mxu0 %v660
    %794 = vmatpush.bf16.msra.mxu0 %v657
    %795 = vmatpush.bf16.msra.mxu0 %v654
    %796 = vmatpush.bf16.msra.mxu0 %v651
    %797 = vmatpush.bf16.msra.mxu0 %v648
    %798 = vmatpush.bf16.msra.mxu0 %v645
    %799 = vmatpush.bf16.msra.mxu0 %v642
    %800 = vmatpush.bf16.msra.mxu0 %v639
    %801 = vmatmul.bf16.gmra.mxu0 %v277
    %v802 = vpop.f32.mrf.mxu0
    %v803 = vadd.f32 %v383, %v802
    %v804 = vpop.f32.mrf.mxu0
    %805 = vdwg.mxu0
    %806 = vmatpush.bf16.msra.mxu0 %v684
    %807 = vmatpush.bf16.msra.mxu0 %v681
    %808 = vmatpush.bf16.msra.mxu0 %v678
    %809 = vmatpush.bf16.msra.mxu0 %v675
    %810 = vmatpush.bf16.msra.mxu0 %v672
    %811 = vmatpush.bf16.msra.mxu0 %v669
    %812 = vmatpush.bf16.msra.mxu0 %v666
    %813 = vmatpush.bf16.msra.mxu0 %v663
    %814 = vmatmul.bf16.gmra.mxu0 %v278
    %v815 = vpop.f32.mrf.mxu0
    %v816 = vadd.f32 %v803, %v815
    %v817 = vpop.f32.mrf.mxu0
    %818 = vdwg.mxu0
    %819 = vmatpush.bf16.msra.mxu0 %v708
    %820 = vmatpush.bf16.msra.mxu0 %v705
    %821 = vmatpush.bf16.msra.mxu0 %v702
    %822 = vmatpush.bf16.msra.mxu0 %v699
    %823 = vmatpush.bf16.msra.mxu0 %v696
    %824 = vmatpush.bf16.msra.mxu0 %v693
    %825 = vmatpush.bf16.msra.mxu0 %v690
    %826 = vmatpush.bf16.msra.mxu0 %v687
    %827 = vmatmul.bf16.gmra.mxu0 %v279
    %v828 = vpop.f32.mrf.mxu0
    %v829 = vadd.f32 %v816, %v828
    %v830 = vpop.f32.mrf.mxu0
    %831 = vdwg.mxu0
    %832 = vmatpush.bf16.msra.mxu0 0
    %833 = vmatpush.bf16.msra.mxu0 0
    %834 = vmatpush.bf16.msra.mxu0 0
    %835 = vmatpush.bf16.msra.mxu0 0
    %836 = vmatpush.bf16.msra.mxu0 0
    %837 = vmatpush.bf16.msra.mxu0 0
    %838 = vmatpush.bf16.msra.mxu0 0
    %839 = vmatpush.bf16.msra.mxu0 %v711
    %840 = vmatmul.bf16.gmra.mxu0 %v791
    %v841 = vpop.f32.mrf.mxu0
    %v842 = vadd.f32 %v829, %v841
    %v843 = vpop.f32.mrf.mxu0
    %844 = vdwg.mxu0
    %845 = vmatpush.bf16.msra.mxu0 %v661
    %846 = vmatpush.bf16.msra.mxu0 %v658
    %847 = vmatpush.bf16.msra.mxu0 %v655
    %848 = vmatpush.bf16.msra.mxu0 %v652
    %849 = vmatpush.bf16.msra.mxu0 %v649
    %850 = vmatpush.bf16.msra.mxu0 %v646
    %851 = vmatpush.bf16.msra.mxu0 %v643
    %852 = vmatpush.bf16.msra.mxu0 %v640
    %853 = vmatmul.bf16.gmra.mxu0 %v277
    %v854 = vpop.f32.mrf.mxu0
    %v855 = vadd.f32 %v384, %v854
    %v856 = vpop.f32.mrf.mxu0
    %857 = vdwg.mxu0
    %858 = vmatpush.bf16.msra.mxu0 %v685
    %859 = vmatpush.bf16.msra.mxu0 %v682
    %860 = vmatpush.bf16.msra.mxu0 %v679
    %861 = vmatpush.bf16.msra.mxu0 %v676
    %862 = vmatpush.bf16.msra.mxu0 %v673
    %863 = vmatpush.bf16.msra.mxu0 %v670
    %864 = vmatpush.bf16.msra.mxu0 %v667
    %865 = vmatpush.bf16.msra.mxu0 %v664
    %866 = vmatmul.bf16.gmra.mxu0 %v278
    %v867 = vpop.f32.mrf.mxu0
    %v868 = vadd.f32 %v855, %v867
    %v869 = vpop.f32.mrf.mxu0
    %870 = vdwg.mxu0
    %871 = vmatpush.bf16.msra.mxu0 %v709
    %872 = vmatpush.bf16.msra.mxu0 %v706
    %873 = vmatpush.bf16.msra.mxu0 %v703
    %874 = vmatpush.bf16.msra.mxu0 %v700
    %875 = vmatpush.bf16.msra.mxu0 %v697
    %876 = vmatpush.bf16.msra.mxu0 %v694
    %877 = vmatpush.bf16.msra.mxu0 %v691
    %878 = vmatpush.bf16.msra.mxu0 %v688
    %879 = vmatmul.bf16.gmra.mxu0 %v279
    %v880 = vpop.f32.mrf.mxu0
    %v881 = vadd.f32 %v868, %v880
    %v882 = vpop.f32.mrf.mxu0
    %883 = vdwg.mxu0
    %884 = vmatpush.bf16.msra.mxu0 0
    %885 = vmatpush.bf16.msra.mxu0 0
    %886 = vmatpush.bf16.msra.mxu0 0
    %887 = vmatpush.bf16.msra.mxu0 0
    %888 = vmatpush.bf16.msra.mxu0 0
    %889 = vmatpush.bf16.msra.mxu0 0
    %890 = vmatpush.bf16.msra.mxu0 0
    %891 = vmatpush.bf16.msra.mxu0 %v712
    %892 = vmatmul.bf16.gmra.mxu0 %v791
    %v893 = vpop.f32.mrf.mxu0
    %v894 = vadd.f32 %v881, %v893
    %v895 = vpop.f32.mrf.mxu0
    %896 = vdwg.mxu0
    %897 = vmatpush.bf16.msra.mxu0 %v662
    %898 = vmatpush.bf16.msra.mxu0 %v659
    %899 = vmatpush.bf16.msra.mxu0 %v656
    %900 = vmatpush.bf16.msra.mxu0 %v653
    %901 = vmatpush.bf16.msra.mxu0 %v650
    %902 = vmatpush.bf16.msra.mxu0 %v647
    %903 = vmatpush.bf16.msra.mxu0 %v644
    %904 = vmatpush.bf16.msra.mxu0 %v641
    %905 = vmatmul.bf16.gmra.mxu0 %v277
    %v906 = vpop.f32.mrf.mxu0
    %v907 = vadd.f32 %v385, %v906
    %v908 = vpop.f32.mrf.mxu0
    %909 = vdwg.mxu0
    %910 = vmatpush.bf16.msra.mxu0 %v686
    %911 = vmatpush.bf16.msra.mxu0 %v683
    %912 = vmatpush.bf16.msra.mxu0 %v680
    %913 = vmatpush.bf16.msra.mxu0 %v677
    %914 = vmatpush.bf16.msra.mxu0 %v674
    %915 = vmatpush.bf16.msra.mxu0 %v671
    %916 = vmatpush.bf16.msra.mxu0 %v668
    %917 = vmatpush.bf16.msra.mxu0 %v665
    %918 = vmatmul.bf16.gmra.mxu0 %v278
    %v919 = vpop.f32.mrf.mxu0
    %v920 = vadd.f32 %v907, %v919
    %v921 = vpop.f32.mrf.mxu0
    %922 = vdwg.mxu0
    %923 = vmatpush.bf16.msra.mxu0 %v710
    %924 = vmatpush.bf16.msra.mxu0 %v707
    %925 = vmatpush.bf16.msra.mxu0 %v704
    %926 = vmatpush.bf16.msra.mxu0 %v701
    %927 = vmatpush.bf16.msra.mxu0 %v698
    %928 = vmatpush.bf16.msra.mxu0 %v695
    %929 = vmatpush.bf16.msra.mxu0 %v692
    %930 = vmatpush.bf16.msra.mxu0 %v689
    %931 = vmatmul.bf16.gmra.mxu0 %v279
    %v932 = vpop.f32.mrf.mxu0
    %v933 = vadd.f32 %v920, %v932
    %v934 = vpop.f32.mrf.mxu0
    %935 = vdwg.mxu0
    %936 = vmatpush.bf16.msra.mxu0 0
    %937 = vmatpush.bf16.msra.mxu0 0
    %938 = vmatpush.bf16.msra.mxu0 0
    %939 = vmatpush.bf16.msra.mxu0 0
    %940 = vmatpush.bf16.msra.mxu0 0
    %941 = vmatpush.bf16.msra.mxu0 0
    %942 = vmatpush.bf16.msra.mxu0 0
    %943 = vmatpush.bf16.msra.mxu0 %v713
    %944 = vmatmul.bf16.gmra.mxu0 %v791
    %v945 = vpop.f32.mrf.mxu0
    %v946 = vadd.f32 %v933, %v945
    %v947 = vpop.f32.mrf.mxu0
    %948 = vdwg.mxu0
    %v949 = vmax.f32 %v842, 0.0
    %v950 = vmax.f32 %v894, 0.0
    %v951 = vmax.f32 %v946, 0.0
    %v952 = vld [vmem:[#allocation8] sm:$0x7]
    %v953 = vunpack.c.l.bf16 %v952
    %v955 = vperm.slane %v953, 0
    %v956 = vperm.slane %v953, 2
    %v957 = vperm.slane %v953, 4
    %v961 = vperm.slane %v955, 0
    %v962 = vperm.slane %v956, 0
    %v963 = vperm.slane %v957, 0
    %v964 = vmul.f32 %v949, %v961
    %v965 = vmul.f32 %v950, %v962
    %v966 = vmul.f32 %v951, %v963
    %v967 = vadd.f32 %v964, %v965
    %vm968 = vcmask 359424
    %v969 = vsel %vm968, %v966, 0.0
    %v970 = vadd.f32 %v967, %v969
    %971 = vadd.xlane.f32.xlu0 %v970
    %v972 = vpop.xlane.xlu0 %971
    %v973 = vld [vmem:[#allocation2] sm:$0x1]
    %v975 = vperm.slane %v973, 0
    %v977 = vadd.f32 %v972, %v975
    %vm978 = vcmask 7168
    %979 = vst.msk [vmem:[%s9] sm:$0xff] %vm978, %v977
    // Predicated region
    $region54: #{tpu_custom_call.1} parent=1 // pred_check
      _
    $region55: #{tpu_custom_call.1} parent=1 // pred_check_branch
      %981 = sbr.rel (0) target = $region57
    $region56: #{tpu_custom_call.1} parent=1 // pred_region
      _
    $region57: #{tpu_custom_call.1} parent=1 // pred_fallthru
      _
    // Predicated region
    $region58: #{tpu_custom_call.1} parent=1 // pred_check
      _
    $region59: #{tpu_custom_call.1} parent=1 // pred_check_branch
      %983 = sbr.rel (0) target = $region61
    $region60: #{tpu_custom_call.1} parent=1 // pred_region
      _
    $region61: #{tpu_custom_call.1} parent=1 // pred_fallthru
      _
    %984 = vsyncpa [#allocation4], 1
    %985 = vsyncpa [#allocation6], 1
    %986 = vsyncpa [#allocation9], 1

</llo_original>
